<compile_context>
chip_gen: v6e
topology: v6e:2x2x1
jax: 0.10.0
libtpu: 0.0.40
codegen_flags: <defaults>
</compile_context>

<pallas_src>
import math
from functools import partial
from typing import NamedTuple

import jax
import jax.numpy as jnp
from jax.experimental import pallas as pl
from jax.experimental.pallas import tpu as pltpu


_TM_MAX = 256                       # default max batch-tile rows
_TN_MAX = 2048                      # default max class-tile columns
_TILE_VMEM_BUDGET = 40 * 1024 * 1024  # conservative for v7x (64 MiB/TC); raise on v5e/v6e


def _round_up(x, m):
    return ((x + m - 1) // m) * m


def _pick_tn(C, D, matmul_bytes, out_bytes=4, budget=_TILE_VMEM_BUDGET):
    """Largest lane-dense class tile whose double-buffered tiles fit the budget."""
    if C <= 256:
        return _round_up(C, 128)
    cap = min(_TN_MAX, _round_up(C, 256))
    best, tn = 256, 256
    while tn <= cap:
        need = (2 * D * tn * matmul_bytes          # weight tile (double-buffered)
                + 2 * _TM_MAX * D * matmul_bytes   # activation tile
                + 2 * _TM_MAX * tn * out_bytes)    # output tile
        if need <= budget:
            best = tn
        tn += 256
    return best


class ArcWeights(NamedTuple):
    """Prepared (cacheable across training steps) weight-side operands."""
    wt: jax.Array          # (D, Cp) matmul_dtype, transposed, class-padded
    inv_norm_s: jax.Array  # (1, Cp) f32, = s / ||w_row||, 0 in padded columns
    out_features: int      # C (unpadded)
    tn: int                # class tile width
    s: float               # scale folded into inv_norm_s


def prepare_arc_weight(weight, *, s=10.0, matmul_dtype=jnp.bfloat16,
                       block_n=None, vmem_tile_budget=_TILE_VMEM_BUDGET):
    """One-time weight prep: f32 row norms, cast, transpose, pad, fold s.

    Call once per weight update; the result is reused by every forward call so
    the per-step HBM traffic is just one streaming pass over the prepared
    (D, Cp) weight.
    """
    C, D = weight.shape
    s = float(s)

    w32 = weight.astype(jnp.float32)
    # F.normalize(W) row norms (eps=1e-12); fold s so the kernel epilogue has
    # no trailing `* s` over the full (tm, tn) tile.
    inv_norm_s = s / jnp.maximum(jnp.sqrt(jnp.sum(w32 * w32, axis=1)), 1e-12)

    mm_bytes = jnp.dtype(matmul_dtype).itemsize
    if block_n is None:
        tn = _pick_tn(C, D, mm_bytes, budget=vmem_tile_budget)
    else:
        tn = min(block_n, _round_up(C, 128))
    tn = max(128, (tn // 128) * 128)          # lane-dense, unmasked stores
    Cp = _round_up(C, tn)

    wt = weight.astype(matmul_dtype).T        # (D, C): plain MXU layout, no in-kernel transpose
    if Cp != C:
        wt = jnp.pad(wt, ((0, 0), (0, Cp - C)))
        inv_norm_s = jnp.pad(inv_norm_s, (0, Cp - C))  # padded classes -> cos 0

    return ArcWeights(wt=wt,
                      inv_norm_s=inv_norm_s.reshape(1, Cp).astype(jnp.float32),
                      out_features=C, tn=tn, s=s)


def _arc_kernel(x_ref, wt_ref, inv_norm_s_ref, labels_ref, o_ref,
                *, s, cos_m, sin_m, th, mm, tn):
    # (tm, D) @ (D, tn) -> (tm, tn); bf16/f32 operands, f32 MXU accumulation.
    logits = jnp.dot(x_ref[...], wt_ref[...], preferred_element_type=jnp.float32)

    # s * cos(theta), clipped.  inv_norm_s = s / ||w_row||, so the clip bound
    # is [-s, s]; identical to s * clip(cos, -1, 1) up to fp rounding.
    cos_s = jnp.clip(logits * inv_norm_s_ref[...], -s, s)

    # One-hot mask for this class tile: shift the labels by the tile origin
    # once ((tm,1) scalar path) instead of adding it to the full (tm,tn) iota.
    class_base = pl.program_id(0) * tn
    lab_local = labels_ref[...] - class_base                      # (tm, 1)
    lane = jax.lax.broadcasted_iota(jnp.int32, cos_s.shape, 1)    # (tm, tn)
    mask = lane == lab_local

    # Margin math only on the label column: lane-reduce s*cos at the label
    # into (tm, 1) (XLU slot), then sqrt / cos(theta+m) / select on tm values.
    cos_lab = jnp.sum(jnp.where(mask, cos_s, 0.0), axis=1, keepdims=True) * (1.0 / s)
    sin_lab = jnp.sqrt(jnp.maximum(1.0 - cos_lab * cos_lab, 0.0))
    marg = cos_lab * cos_m - sin_lab * sin_m
    # Single select reproduces the module's where + masked re-assignment
    # (the equality case lands on cos - mm either way).
    marg = jnp.where(cos_lab > th, marg, cos_lab - mm)
    marg_s = marg * s                                             # (tm, 1)

    # Rows whose label falls outside this tile (or padded rows, label=-1) have
    # an all-false mask, so the garbage marg_s for them is never selected.
    o_ref[...] = jnp.where(mask, marg_s, cos_s).astype(o_ref.dtype)


def arc_forward(inputs, labels, aw: ArcWeights, *, margin=0.5,
                block_m=None, out_dtype=jnp.float32):
    """inputs: (B, D); labels: (B,) int; aw: prepare_arc_weight(...) result.
    Returns (B, out_features) ArcFace logits in out_dtype."""
    B, D = inputs.shape
    Dw, Cp = aw.wt.shape
    assert D == Dw, "weight in_features mismatch"
    C, tn, s = aw.out_features, aw.tn, aw.s

    cos_m = math.cos(margin)
    sin_m = math.sin(margin)
    th = math.cos(math.pi - margin)
    mm = math.sin(math.pi - margin) * margin

    # Batch tile: multiple of 16 (bf16 sublane packing; also a multiple of 8
    # for f32), capped at _TM_MAX / block_m.
    tm = min(block_m if block_m is not None else _TM_MAX, _round_up(B, 16))
    tm = max(16, (tm // 16) * 16)
    Bp = _round_up(B, tm)

    x = inputs.astype(aw.wt.dtype)
    if Bp != B:
        x = jnp.pad(x, ((0, Bp - B), (0, 0)))
    labels2d = labels.astype(jnp.int32).reshape(B, 1)
    if Bp != B:
        labels2d = jnp.pad(labels2d, ((0, Bp - B), (0, 0)), constant_values=-1)

    kernel = partial(_arc_kernel, s=s, cos_m=cos_m, sin_m=sin_m,
                     th=th, mm=mm, tn=tn)

    # Derive the scoped-VMEM limit from the actual (double-buffered) footprint.
    mm_bytes = jnp.dtype(aw.wt.dtype).itemsize
    out_bytes = jnp.dtype(out_dtype).itemsize
    tile_bytes = (2 * (tm * D + D * tn) * mm_bytes
                  + 2 * tm * tn * out_bytes
                  + 2 * (tn + tm) * 4)
    vmem_limit = max(32 * 1024 * 1024, int(tile_bytes * 5) // 4)

    out = pl.pallas_call(
        kernel,
        out_shape=jax.ShapeDtypeStruct((Bp, Cp), out_dtype),
        grid_spec=pl.GridSpec(
            # Class tiles on the OUTER axis, batch tiles on the INNER (fast)
            # axis: the (D, tn) weight tile's block index is constant across
            # the inner loop, so it is DMA'd once per class tile (total weight
            # traffic = C*D bytes); only the small (tm, D) x tile re-streams.
            grid=(Cp // tn, Bp // tm),
            in_specs=[
                pl.BlockSpec((tm, D), lambda j, i: (i, 0)),   # activations
                pl.BlockSpec((D, tn), lambda j, i: (0, j)),   # transposed weight
                pl.BlockSpec((1, tn), lambda j, i: (0, j)),   # s / ||w_row||
                pl.BlockSpec((tm, 1), lambda j, i: (i, 0)),   # labels
            ],
            out_specs=pl.BlockSpec((tm, tn), lambda j, i: (i, j)),
        ),
        compiler_params=pltpu.CompilerParams(
            # No reduction axis (D is un-tiled): both axes are independent, so
            # both TensorCores can be used on v7x.
            dimension_semantics=("parallel", "parallel"),
            vmem_limit_bytes=vmem_limit,
        ),
    )(x, aw.wt, aw.inv_norm_s, labels2d)

    return out[:B, :C]


def arc_module_forward(inputs, weight, labels, *, s=10.0, margin=0.5,
                       matmul_dtype=jnp.bfloat16, block_m=None, block_n=None,
                       out_dtype=jnp.float32):
    """Convenience wrapper: prep + forward in one call (prep is cheap for the
    demo; in training, call prepare_arc_weight once and reuse the result)."""
    aw = prepare_arc_weight(weight, s=s, matmul_dtype=matmul_dtype,
                            block_n=block_n)
    return arc_forward(inputs, labels, aw, margin=margin, block_m=block_m,
                       out_dtype=out_dtype)


def _reference(inputs, weight, labels, *, s=10.0, margin=0.5,
               matmul_dtype=jnp.float32):
    """Pure-JAX mirror of the module math (operands cast like the kernel)."""
    cos_m, sin_m = math.cos(margin), math.sin(margin)
    th = math.cos(math.pi - margin)
    mm = math.sin(math.pi - margin) * margin
    inv_norm = 1.0 / jnp.maximum(
        jnp.sqrt(jnp.sum(weight.astype(jnp.float32) ** 2, axis=1)), 1e-12)
    logits = jnp.dot(inputs.astype(matmul_dtype),
                     weight.astype(matmul_dtype).T,
                     preferred_element_type=jnp.float32)
    cos_th = jnp.clip(logits * inv_norm[None, :], -1.0, 1.0)
    sin_th = jnp.sqrt(1.0 - cos_th ** 2)
    cos_th_m = cos_th * cos_m - sin_th * sin_m
    cos_th_m = jnp.where(cos_th > th, cos_th_m, cos_th - mm)
    onehot = jax.nn.one_hot(labels, weight.shape[0], dtype=jnp.float32)
    return (onehot * cos_th_m + (1.0 - onehot) * cos_th) * s


if __name__ == "__main__":
    B = 24          # batch (not a multiple of 16 -> exercises batch padding)
    IN_FEAT = 256   # in_features (embedding dim)
    OUT_FEAT = 1024 # out_features (classes)

    key = jax.random.PRNGKey(0)
    kx, kw, kl = jax.random.split(key, 3)

    # Small-magnitude inputs keep cos(theta) well away from the +/-1 clip and
    # the th decision boundary so f32-vs-bf16 rounding cannot flip a branch in
    # this deterministic self-check.
    inputs = 0.05 * jax.random.normal(kx, (B, IN_FEAT), dtype=jnp.float32)
    xavier_std = math.sqrt(2.0 / (IN_FEAT + OUT_FEAT))
    weight = xavier_std * jax.random.normal(kw, (OUT_FEAT, IN_FEAT),
                                            dtype=jnp.float32)
    labels = jax.random.randint(kl, (B,), 0, OUT_FEAT, dtype=jnp.int32)

    # bf16 fast path, with small forced tiles (block_m=16, block_n=512) so the
    # test exercises multiple batch AND class tiles plus the padded rows.
    aw_bf16 = prepare_arc_weight(weight, s=10.0, matmul_dtype=jnp.bfloat16,
                                 block_n=512)
    out_bf16 = arc_forward(inputs, labels, aw_bf16, margin=0.5, block_m=16)
    out_bf16 = jax.block_until_ready(out_bf16)
    ref_bf16 = _reference(inputs, weight, labels, s=10.0, margin=0.5,
                          matmul_dtype=jnp.bfloat16)
    assert out_bf16.shape == (B, OUT_FEAT)
    assert jnp.allclose(out_bf16, ref_bf16, atol=5e-3, rtol=5e-3), \
        "bf16-path mismatch vs reference"

    # Exact-semantics path: f32 matmul (matches the PyTorch non-AMP module),
    # auto-sized tiles (single class tile here).
    out_f32 = arc_module_forward(inputs, weight, labels, s=10.0, margin=0.5,
                                 matmul_dtype=jnp.float32)
    out_f32 = jax.block_until_ready(out_f32)
    ref_f32 = _reference(inputs, weight, labels, s=10.0, margin=0.5,
                         matmul_dtype=jnp.float32)
    assert jnp.allclose(out_f32, ref_f32, atol=1e-3, rtol=1e-3), \
        "f32-path mismatch vs reference"

    print("KERNEL_OK")
</pallas_src>

<mosaic_0001>
module attributes {stable_mosaic.version = 11 : i64} {
  func.func @_arc_kernel(%arg0: i32, %arg1: i32, %arg2: memref<16x256xbf16, #tpu.memory_space<vmem>>, %arg3: memref<256x512xbf16, #tpu.memory_space<vmem>>, %arg4: memref<1x512xf32, #tpu.memory_space<vmem>>, %arg5: memref<16x1xi32, #tpu.memory_space<vmem>>, %arg6: memref<16x512xf32, #tpu.memory_space<vmem>>) attributes {dimension_semantics = [#tpu.dimension_semantics<parallel>, #tpu.dimension_semantics<parallel>], iteration_bounds = array<i64: 2, 2>, scalar_prefetch = 0 : i64, scratch_operands = 0 : i64, tpu.core_type = #tpu.core_type<tc>, window_params = [{transform_indices = @transform_0, window_bounds = array<i64: 16, 256>}, {transform_indices = @transform_1, window_bounds = array<i64: 256, 512>}, {transform_indices = @transform_2, window_bounds = array<i64: 1, 512>}, {transform_indices = @transform_3, window_bounds = array<i64: 16, 1>}, {transform_indices = @transform_4, window_bounds = array<i64: 16, 512>}]} {
    %c0 = arith.constant 0 : index
    %c0_0 = arith.constant 0 : index
    %0 = vector.load %arg2[%c0, %c0_0] : memref<16x256xbf16, #tpu.memory_space<vmem>>, vector<16x256xbf16>
    %c0_1 = arith.constant 0 : index
    %c0_2 = arith.constant 0 : index
    %1 = vector.load %arg3[%c0_1, %c0_2] : memref<256x512xbf16, #tpu.memory_space<vmem>>, vector<256x512xbf16>
    %cst = arith.constant dense<0.000000e+00> : vector<16x512xf32>
    %2 = tpu.matmul %0, %1, %cst {dimension_numbers = #tpu.dot_dimension_numbers<[1], [0], [0], [1], [0, 0, 1, 1], [], []>} : vector<16x256xbf16>, vector<256x512xbf16>, vector<16x512xf32> -> vector<16x512xf32>
    %c0_3 = arith.constant 0 : index
    %c0_4 = arith.constant 0 : index
    %3 = vector.load %arg4[%c0_3, %c0_4] : memref<1x512xf32, #tpu.memory_space<vmem>>, vector<1x512xf32>
    %4 = vector.broadcast %3 : vector<1x512xf32> to vector<16x512xf32>
    %5 = arith.mulf %2, %4 : vector<16x512xf32>
    %cst_5 = arith.constant -1.000000e+01 : f32
    %cst_6 = arith.constant 1.000000e+01 : f32
    %6 = vector.broadcast %cst_5 : f32 to vector<16x512xf32>
    %7 = arith.maximumf %6, %5 : vector<16x512xf32>
    %8 = vector.broadcast %cst_6 : f32 to vector<16x512xf32>
    %9 = arith.minimumf %8, %7 : vector<16x512xf32>
    %c512_i32 = arith.constant 512 : i32
    %10 = arith.muli %arg0, %c512_i32 : i32
    %c0_7 = arith.constant 0 : index
    %c0_8 = arith.constant 0 : index
    %11 = vector.load %arg5[%c0_7, %c0_8] : memref<16x1xi32, #tpu.memory_space<vmem>>, vector<16x1xi32>
    %12 = vector.broadcast %10 : i32 to vector<16x1xi32>
    %13 = arith.subi %11, %12 : vector<16x1xi32>
    %14 = tpu.iota {dimensions = array<i32: 1>} : vector<16x512xi32>
    %15 = vector.broadcast %13 : vector<16x1xi32> to vector<16x512xi32>
    %16 = arith.cmpi eq, %14, %15 : vector<16x512xi32>
    %cst_9 = arith.constant 0.000000e+00 : f32
    %17 = vector.broadcast %cst_9 : f32 to vector<16x512xf32>
    %18 = arith.select %16, %9, %17 : vector<16x512xi1>, vector<16x512xf32>
    %cst_10 = arith.constant dense<0.000000e+00> : vector<16xf32>
    %19 = vector.multi_reduction <add>, %18, %cst_10 [1] : vector<16x512xf32> to vector<16xf32>
    %20 = vector.shape_cast %19 : vector<16xf32> to vector<16x1xf32>
    %cst_11 = arith.constant 1.000000e-01 : f32
    %21 = vector.broadcast %cst_11 : f32 to vector<16x1xf32>
    %22 = arith.mulf %20, %21 : vector<16x1xf32>
    %23 = arith.mulf %22, %22 : vector<16x1xf32>
    %cst_12 = arith.constant 1.000000e+00 : f32
    %24 = vector.broadcast %cst_12 : f32 to vector<16x1xf32>
    %25 = arith.subf %24, %23 : vector<16x1xf32>
    %cst_13 = arith.constant 0.000000e+00 : f32
    %26 = vector.broadcast %cst_13 : f32 to vector<16x1xf32>
    %27 = arith.maximumf %25, %26 : vector<16x1xf32>
    %28 = math.sqrt %27 : vector<16x1xf32>
    %cst_14 = arith.constant 0.87758255 : f32
    %29 = vector.broadcast %cst_14 : f32 to vector<16x1xf32>
    %30 = arith.mulf %22, %29 : vector<16x1xf32>
    %cst_15 = arith.constant 0.47942555 : f32
    %31 = vector.broadcast %cst_15 : f32 to vector<16x1xf32>
    %32 = arith.mulf %28, %31 : vector<16x1xf32>
    %33 = arith.subf %30, %32 : vector<16x1xf32>
    %cst_16 = arith.constant -0.87758255 : f32
    %34 = vector.broadcast %cst_16 : f32 to vector<16x1xf32>
    %35 = arith.cmpf ogt, %22, %34 : vector<16x1xf32>
    %cst_17 = arith.constant 0.239712775 : f32
    %36 = vector.broadcast %cst_17 : f32 to vector<16x1xf32>
    %37 = arith.subf %22, %36 : vector<16x1xf32>
    %38 = arith.select %35, %33, %37 : vector<16x1xi1>, vector<16x1xf32>
    %cst_18 = arith.constant 1.000000e+01 : f32
    %39 = vector.broadcast %cst_18 : f32 to vector<16x1xf32>
    %40 = arith.mulf %38, %39 : vector<16x1xf32>
    %41 = vector.shape_cast %40 : vector<16x1xf32> to vector<16x1xf32>
    %42 = vector.broadcast %41 : vector<16x1xf32> to vector<16x512xf32>
    %43 = arith.select %16, %42, %9 : vector<16x512xi1>, vector<16x512xf32>
    %c0_19 = arith.constant 0 : index
    %c0_20 = arith.constant 0 : index
    %44 = vector.load %arg6[%c0_19, %c0_20] : memref<16x512xf32, #tpu.memory_space<vmem>>, vector<16x512xf32>
    tpu.vector_store %arg6[%c0_19, %c0_20], %43 {strides = array<i32>} : memref<16x512xf32, #tpu.memory_space<vmem>>, vector<16x512xf32>,
    return
  }
  func.func @transform_0(%arg0: i32, %arg1: i32) -> (i32, i32) {
    %c0_i32 = arith.constant 0 : i32
    %c0_i32_0 = arith.constant 0 : i32
    return %arg1, %c0_i32 : i32, i32
  }
  func.func @transform_1(%arg0: i32, %arg1: i32) -> (i32, i32) {
    %c0_i32 = arith.constant 0 : i32
    %c0_i32_0 = arith.constant 0 : i32
    return %c0_i32, %arg0 : i32, i32
  }
  func.func @transform_2(%arg0: i32, %arg1: i32) -> (i32, i32) {
    %c0_i32 = arith.constant 0 : i32
    %c0_i32_0 = arith.constant 0 : i32
    return %c0_i32, %arg0 : i32, i32
  }
  func.func @transform_3(%arg0: i32, %arg1: i32) -> (i32, i32) {
    %c0_i32 = arith.constant 0 : i32
    %c0_i32_0 = arith.constant 0 : i32
    return %arg1, %c0_i32 : i32, i32
  }
  func.func @transform_4(%arg0: i32, %arg1: i32) -> (i32, i32) {
    %c0_i32 = arith.constant 0 : i32
    return %arg1, %arg0 : i32, i32
  }
}

</mosaic_0001>

<llo_original>
// kernel: tpu_custom_call.1
$region0: #{tpu_custom_call.1}
  #allocation0 [shape = 'u32[]', space=smem, size = 0x4, offset = 0x4, fixed_abs, tag = 'smem constant byte address 0x4 - core index']
  #allocation1 [shape = 'u32[144,128]{1,0:T(1,128)}', space=vmem, size = 0x12000, scoped, tag = 'internal scratch']
  %s0 = inlined_call_operand.vmem [shape: bf16[32,256], index: 0, kind: input, shape index: {}]
  %s1 = inlined_call_operand.hbm [shape: bf16[256,1024], index: 1, kind: input, shape index: {}]
  %s2 = inlined_call_operand.hbm [shape: f32[1,1024], index: 2, kind: input, shape index: {}]
  %s3 = inlined_call_operand.vmem [shape: s32[32,1], index: 3, kind: input, shape index: {}]
  %s4 = inlined_call_operand.hbm [shape: f32[32,1024], index: 4, kind: output, shape index: {}]
  %s5 = sld [smem:[#allocation0]]
  $region57: #{tpu_custom_call.1} parent=0
    _
  %s7 = ssub.s32 1, %s5
  %s8 = scalar_select 0, %s7, %s5
  $region1: #{tpu_custom_call.1} parent=0
    #allocation2 [shape = 'u8[524288]{0}', space=vmem, size = 0x80000, scoped, tag = 'input window, operand 1']
    #allocation3 [shape = 's32[2]{0}', space=sflag, size = 0x8, scoped, tag = 'scoped memory for tpu_custom_call.1']
    #allocation4 [shape = 's32[2]{0}', space=sflag, size = 0x8, scoped, tag = 'scoped memory for tpu_custom_call.1']
    #allocation5 [shape = 'u8[4096]{0}', space=vmem, size = 0x1000, scoped, tag = 'input window, operand 2']
    #allocation6 [shape = 's32[2]{0}', space=sflag, size = 0x8, scoped, tag = 'scoped memory for tpu_custom_call.1']
    #allocation7 [shape = 'u8[65536]{0}', space=vmem, size = 0x10000, scoped, tag = 'output window, operand 0']
    %9 = vsyncpa [#allocation3], 0
    %s10 = scalar_lea.sflag [#allocation3], 1
    %11 = vsyncpa %s10, 0
    %12 = vsyncpa [#allocation6], 0
    %s13 = scalar_lea.sflag [#allocation6], 1
    %14 = vsyncpa %s13, 0
    %15 = vsyncpa [#allocation4], 0
    %s16 = scalar_lea.sflag [#allocation4], 1
    %17 = vsyncpa %s16, 0
    loop: start=0, step=1, limit=6
    $region2: #{tpu_custom_call.1} parent=1 // loop_pre_header
      _
    $region3: #{tpu_custom_call.1} parent=1 // loop_header
      %s19 = sphi 0, %s23
      %p20 = scmp.ge.s32.totalorder %s19, 6
      %s26 = sphi 0, %s38
      %s27 = sphi 0, %s34
      %s28 = sphi 0, %s26
      %s29 = sphi 0, %s27
      %s30 = sphi 0, %s28
      %s31 = sphi 0, %s29
      %s41 = sphi 0, %s43
      %s44 = sphi 0, %s41
      %s45 = sphi 0, %s44
      %s61 = sphi 0, %s45
      %s67 = sphi 0, %s69
      %s70 = sphi 0, %s67
      %s71 = sphi 0, %s70
      %s87 = sphi 0, %s71
      %s93 = sphi 0, %s95
      %s96 = sphi 0, %s93
      %s97 = sphi 0, %s96
      %s113 = sphi 0, %s97
      %s119 = sphi 0, %s121
      %s122 = sphi 0, %s119
      %s123 = sphi 0, %s122
      %s139 = sphi 0, %s123
      %s147 = sphi 0, %s149
      %s150 = sphi 0, %s147
      %s151 = sphi 0, %s150
      %s167 = sphi 0, %s151
    $region4: #{tpu_custom_call.1} parent=1 // loop_header_branch
      %22 = sbr.rel (%p20) target = $region8
    $region5: #{tpu_custom_call.1} parent=1 // loop_body
      %s24 = ssub.s32 %s19, 1
      %s25 = ssub.s32 %s19, 2
      %s32 = sadd.s32 1, %s27
      %p33 = scmp.ge.s32.totalorder %s32, 2
      %s34 = scalar_select %p33, 0, %s32
      %s35 = sadd.s32 1, %s26
      %s36 = scalar_select %p33, %s35, %s26
      %p37 = scmp.ge.s32.totalorder %s36, 2
      %s38 = scalar_select %p37, 0, %s36
      %s39 = ssub.s32 %s27, %s34
      %p40 = scmp.eq.s32.totalorder %s39, 0
      %s42 = sadd.s32 %s41, 1
      %s43 = scalar_select %p40, %s41, %s42
      %p46 = pneg %p40
      %p47 = scmp.eq.s32.totalorder %s19, 3
      %p48 = por %p46, %p47
      %p49 = scmp.ne.s32.totalorder %s41, %s44
      %p50 = scmp.eq.s32.totalorder %s19, 0
      %p51 = por %p49, %p50
      %p52 = scmp.ne.s32.totalorder %s41, %s44
      %p53 = scmp.eq.s32.totalorder %s24, 3
      %p54 = por %p52, %p53
      %p55 = scmp.ne.s32.totalorder %s44, %s45
      %p56 = scmp.eq.s32.totalorder %s24, 0
      %p57 = por %p55, %p56
      %p58 = scmp.ne.s32.totalorder %s44, %s45
      %p59 = scmp.eq.s32.totalorder %s25, 3
      %p60 = por %p58, %p59
      %p62 = scmp.ne.s32.totalorder %s45, %s61
      %p63 = scmp.eq.s32.totalorder %s25, 0
      %p64 = por %p62, %p63
      %s65 = ssub.s32 %s26, %s38
      %p66 = scmp.eq.s32.totalorder %s65, 0
      %s68 = sadd.s32 %s67, 1
      %s69 = scalar_select %p66, %s67, %s68
      %p72 = pneg %p66
      %p73 = scmp.eq.s32.totalorder %s19, 3
      %p74 = por %p72, %p73
      %p75 = scmp.ne.s32.totalorder %s67, %s70
      %p76 = scmp.eq.s32.totalorder %s19, 0
      %p77 = por %p75, %p76
      %p78 = scmp.ne.s32.totalorder %s67, %s70
      %p79 = scmp.eq.s32.totalorder %s24, 3
      %p80 = por %p78, %p79
      %p81 = scmp.ne.s32.totalorder %s70, %s71
      %p82 = scmp.eq.s32.totalorder %s24, 0
      %p83 = por %p81, %p82
      %p84 = scmp.ne.s32.totalorder %s70, %s71
      %p85 = scmp.eq.s32.totalorder %s25, 3
      %p86 = por %p84, %p85
      %p88 = scmp.ne.s32.totalorder %s71, %s87
      %p89 = scmp.eq.s32.totalorder %s25, 0
      %p90 = por %p88, %p89
      %s91 = ssub.s32 %s26, %s38
      %p92 = scmp.eq.s32.totalorder %s91, 0
      %s94 = sadd.s32 %s93, 1
      %s95 = scalar_select %p92, %s93, %s94
      %p98 = pneg %p92
      %p99 = scmp.eq.s32.totalorder %s19, 3
      %p100 = por %p98, %p99
      %p101 = scmp.ne.s32.totalorder %s93, %s96
      %p102 = scmp.eq.s32.totalorder %s19, 0
      %p103 = por %p101, %p102
      %p104 = scmp.ne.s32.totalorder %s93, %s96
      %p105 = scmp.eq.s32.totalorder %s24, 3
      %p106 = por %p104, %p105
      %p107 = scmp.ne.s32.totalorder %s96, %s97
      %p108 = scmp.eq.s32.totalorder %s24, 0
      %p109 = por %p107, %p108
      %p110 = scmp.ne.s32.totalorder %s96, %s97
      %p111 = scmp.eq.s32.totalorder %s25, 3
      %p112 = por %p110, %p111
      %p114 = scmp.ne.s32.totalorder %s97, %s113
      %p115 = scmp.eq.s32.totalorder %s25, 0
      %p116 = por %p114, %p115
      %s117 = ssub.s32 %s27, %s34
      %p118 = scmp.eq.s32.totalorder %s117, 0
      %s120 = sadd.s32 %s119, 1
      %s121 = scalar_select %p118, %s119, %s120
      %p124 = pneg %p118
      %p125 = scmp.eq.s32.totalorder %s19, 3
      %p126 = por %p124, %p125
      %p127 = scmp.ne.s32.totalorder %s119, %s122
      %p128 = scmp.eq.s32.totalorder %s19, 0
      %p129 = por %p127, %p128
      %p130 = scmp.ne.s32.totalorder %s119, %s122
      %p131 = scmp.eq.s32.totalorder %s24, 3
      %p132 = por %p130, %p131
      %p133 = scmp.ne.s32.totalorder %s122, %s123
      %p134 = scmp.eq.s32.totalorder %s24, 0
      %p135 = por %p133, %p134
      %p136 = scmp.ne.s32.totalorder %s122, %s123
      %p137 = scmp.eq.s32.totalorder %s25, 3
      %p138 = por %p136, %p137
      %p140 = scmp.ne.s32.totalorder %s123, %s139
      %p141 = scmp.eq.s32.totalorder %s25, 0
      %p142 = por %p140, %p141
      %s143 = ssub.s32 %s27, %s34
      %s144 = ssub.s32 %s26, %s38
      %s145 = sor.u32 %s143, %s144
      %p146 = scmp.eq.s32.totalorder %s145, 0
      %s148 = sadd.s32 %s147, 1
      %s149 = scalar_select %p146, %s147, %s148
      %p152 = pneg %p146
      %p153 = scmp.eq.s32.totalorder %s19, 3
      %p154 = por %p152, %p153
      %p155 = scmp.ne.s32.totalorder %s147, %s150
      %p156 = scmp.eq.s32.totalorder %s19, 0
      %p157 = por %p155, %p156
      %p158 = scmp.ne.s32.totalorder %s147, %s150
      %p159 = scmp.eq.s32.totalorder %s24, 3
      %p160 = por %p158, %p159
      %p161 = scmp.ne.s32.totalorder %s150, %s151
      %p162 = scmp.eq.s32.totalorder %s24, 0
      %p163 = por %p161, %p162
      %p164 = scmp.ne.s32.totalorder %s150, %s151
      %p165 = scmp.eq.s32.totalorder %s25, 3
      %p166 = por %p164, %p165
      %p168 = scmp.ne.s32.totalorder %s151, %s167
      %p169 = scmp.eq.s32.totalorder %s25, 0
      %p170 = por %p168, %p169
      %p171 = scmp.le.s32.totalorder 1, %s19
      %p172 = scmp.lt.s32.totalorder %s19, 5
      %p173 = pnand %p171, %p172
      %p174 = pneg %p173
      // Predicated region
      $region9: #{tpu_custom_call.1} parent=5 // pred_check
        _
      $region10: #{tpu_custom_call.1} parent=5 // pred_check_branch
        %176 = sbr.rel (%p173) target = $region12
      $region11: #{tpu_custom_call.1} parent=5 // pred_region
        %s177 = ssub.s32 %s19, 1
      $region12: #{tpu_custom_call.1} parent=5 // pred_fallthru
        _
      %p178 = scmp.lt.s32.totalorder %s19, 4
      // Predicated region
      $region13: #{tpu_custom_call.1} parent=5 // pred_check
        %p179 = pneg %p178
      $region14: #{tpu_custom_call.1} parent=5 // pred_check_branch
        %181 = sbr.rel (%p179) target = $region16
      $region15: #{tpu_custom_call.1} parent=5 // pred_region
        // Predicated region
        $region17: #{tpu_custom_call.1} parent=15 // pred_check
          %p182 = pneg %p51
        $region18: #{tpu_custom_call.1} parent=15 // pred_check_branch
          %184 = sbr.rel (%p182) target = $region20
        $region19: #{tpu_custom_call.1} parent=15 // pred_region
          %s185 = smul.u32 2, %s27
          %p186 = scmp.lt.s32.totalorder %s185, 3
          %s187 = scalar_select %p186, %s185, 3
          %s188 = smul.addr %s187, 2
          %s189 = smul.addr %s188, 4
          %s190 = scalar_lea.vmem %s0, %s189
          %s191 = smul.u32 2, %s27
        $region20: #{tpu_custom_call.1} parent=15 // pred_fallthru
          _
        // Predicated region
        $region21: #{tpu_custom_call.1} parent=15 // pred_check
          %p192 = pneg %p77
        $region22: #{tpu_custom_call.1} parent=15 // pred_check_branch
          %194 = sbr.rel (%p192) target = $region24
        $region23: #{tpu_custom_call.1} parent=15 // pred_region
          %s195 = sand.u32 %s67, 1
          %s196 = scalar_lea.sflag [#allocation3], %s195
          %s197 = sand.u32 %s67, 1
          %s198 = smul.addr %s197, 512
          %s199 = scalar_lea.vmem [#allocation2], %s198
          %s200 = smul.u32 4, %s26
          %s202 = ssub.s32 8192, 8192
          %203 = vsyncadd %s196, %s202
          %s204 = smul.addr %s200, 64
          %s205 = scalar_lea.hbm %s1, %s204
          %s206 = sshll.u32 %s199, 4
          %s207 = int_to_ptr.vmem [resolvable:$true] %s206
          %212 = dma.hbm_to_vmem [thread:$0]  %s205, 8192, %s207, %s196, 512, 256, 16
        $region24: #{tpu_custom_call.1} parent=15 // pred_fallthru
          _
        // Predicated region
        $region25: #{tpu_custom_call.1} parent=15 // pred_check
          %p213 = pneg %p103
        $region26: #{tpu_custom_call.1} parent=15 // pred_check_branch
          %215 = sbr.rel (%p213) target = $region28
        $region27: #{tpu_custom_call.1} parent=15 // pred_region
          %s216 = sand.u32 %s93, 1
          %s217 = scalar_lea.sflag [#allocation6], %s216
          %s218 = sand.u32 %s93, 1
          %s219 = smul.addr %s218, 4
          %s220 = scalar_lea.vmem [#allocation5], %s219
          %s221 = smul.u32 4, %s26
          %s223 = ssub.s32 64, 64
          %224 = vsyncadd %s217, %s223
          %s225 = smul.addr %s221, 16
          %s226 = scalar_lea.hbm %s2, %s225
          %s228 = sshll.u32 %s220, 4
          %s229 = int_to_ptr.vmem [resolvable:$true] %s228
          %231 = dma.hbm_to_vmem [thread:$0]  %s226, 64, %s229, %s217
        $region28: #{tpu_custom_call.1} parent=15 // pred_fallthru
          _
        // Predicated region
        $region29: #{tpu_custom_call.1} parent=15 // pred_check
          %p232 = pneg %p129
        $region30: #{tpu_custom_call.1} parent=15 // pred_check_branch
          %234 = sbr.rel (%p232) target = $region32
        $region31: #{tpu_custom_call.1} parent=15 // pred_region
          %s235 = smul.u32 2, %s27
          %p236 = scmp.lt.s32.totalorder %s235, 3
          %s237 = scalar_select %p236, %s235, 3
          %s238 = smul.addr %s237, 8
          %s239 = scalar_lea.vmem %s3, %s238
          %s240 = smul.u32 2, %s27
        $region32: #{tpu_custom_call.1} parent=15 // pred_fallthru
          _
      $region16: #{tpu_custom_call.1} parent=5 // pred_fallthru
        _
      %p241 = scmp.le.s32.totalorder 1, %s19
      %p242 = scmp.lt.s32.totalorder %s19, 5
      %p243 = pnand %p241, %p242
      %p244 = pneg %p243
      // Predicated region
      $region33: #{tpu_custom_call.1} parent=5 // pred_check
        _
      $region34: #{tpu_custom_call.1} parent=5 // pred_check_branch
        %246 = sbr.rel (%p243) target = $region36
      $region35: #{tpu_custom_call.1} parent=5 // pred_region
        %s247 = ssub.s32 %s19, 1
        %s248 = sand.u32 %s70, 1
        %s249 = scalar_lea.sflag [#allocation3], %s248
        %s250 = sand.u32 %s70, 1
        %s251 = smul.addr %s250, 512
        %s252 = scalar_lea.vmem [#allocation2], %s251
        // Predicated region
        $region37: #{tpu_custom_call.1} parent=35 // pred_check
          %p253 = pneg %p83
        $region38: #{tpu_custom_call.1} parent=35 // pred_check_branch
          %255 = sbr.rel (%p253) target = $region40
        $region39: #{tpu_custom_call.1} parent=35 // pred_region
          %256 = dma.done %s249, 8192
        $region40: #{tpu_custom_call.1} parent=35 // pred_fallthru
          _
        %s257 = sand.u32 %s96, 1
        %s258 = scalar_lea.sflag [#allocation6], %s257
        %s259 = sand.u32 %s96, 1
        %s260 = smul.addr %s259, 4
        %s261 = scalar_lea.vmem [#allocation5], %s260
        // Predicated region
        $region41: #{tpu_custom_call.1} parent=35 // pred_check
          %p262 = pneg %p109
        $region42: #{tpu_custom_call.1} parent=35 // pred_check_branch
          %264 = sbr.rel (%p262) target = $region44
        $region43: #{tpu_custom_call.1} parent=35 // pred_region
          %265 = dma.done %s258, 64
        $region44: #{tpu_custom_call.1} parent=35 // pred_fallthru
          _
        %s266 = smul.u32 2, %s29
        %p267 = scmp.lt.s32.totalorder %s266, 3
        %s268 = scalar_select %p267, %s266, 3
        %s269 = smul.addr %s268, 2
        %s270 = smul.addr %s269, 4
        %s271 = scalar_lea.vmem %s0, %s270
        %p272 = pneg %p57
        %p273 = pneg %p54
        %s274 = sand.u32 %s70, 1
        %s275 = scalar_lea.sflag [#allocation3], %s274
        %s276 = sand.u32 %s70, 1
        %s277 = smul.addr %s276, 512
        %s278 = scalar_lea.vmem [#allocation2], %s277
        %p279 = pneg %p83
        %p280 = pneg %p80
        %s281 = sand.u32 %s96, 1
        %s282 = scalar_lea.sflag [#allocation6], %s281
        %s283 = sand.u32 %s96, 1
        %s284 = smul.addr %s283, 4
        %s285 = scalar_lea.vmem [#allocation5], %s284
        %p286 = pneg %p109
        %p287 = pneg %p106
        %s288 = smul.u32 2, %s29
        %p289 = scmp.lt.s32.totalorder %s288, 3
        %s290 = scalar_select %p289, %s288, 3
        %s291 = smul.addr %s290, 8
        %s292 = scalar_lea.vmem %s3, %s291
        %p293 = pneg %p135
        %p294 = pneg %p132
        %p295 = pneg %p163
        %p296 = pneg %p160
        %s297 = sand.u32 %s150, 1
        %s298 = scalar_lea.sflag [#allocation4], %s297
        %s299 = sand.u32 %s150, 1
        %s300 = smul.addr %s299, 64
        %s301 = scalar_lea.vmem [#allocation7], %s300
        %s302 = smul.u32 2, %s29
        %p303 = scmp.lt.s32.totalorder %s302, 3
        %s304 = scalar_select %p303, %s302, 3
        %s305 = smul.addr %s304, 2
        %s306 = smul.addr %s305, 4
        %s307 = scalar_lea.vmem %s0, %s306
        %s308 = smul.u32 2, %s29
        %s309 = smul.u32 4, %s28
        %s310 = smul.u32 4, %s28
        %s311 = smul.u32 2, %s29
        %p312 = scmp.lt.s32.totalorder %s311, 3
        %s313 = scalar_select %p312, %s311, 3
        %s314 = smul.addr %s313, 8
        %s315 = scalar_lea.vmem %s3, %s314
        %s316 = smul.u32 2, %s29
        %s317 = smul.u32 2, %s29
        %s318 = smul.u32 4, %s28
        %v319 = vld [vmem:[%s307] sm:$0xff]
        %v320 = vld [vmem:[%s307 + $0x8] sm:$0xff]
        %v321 = vld [vmem:[%s252] sm:$0xff]
        %v322 = vld [vmem:[%s252 + $0x8] sm:$0xff]
        %v323 = vld [vmem:[%s252 + $0x10] sm:$0xff]
        %v324 = vld [vmem:[%s252 + $0x18] sm:$0xff]
        %v325 = vld [vmem:[%s252 + $0x20] sm:$0xff]
        %v326 = vld [vmem:[%s252 + $0x28] sm:$0xff]
        %v327 = vld [vmem:[%s252 + $0x30] sm:$0xff]
        %v328 = vld [vmem:[%s252 + $0x38] sm:$0xff]
        %v329 = vld [vmem:[%s252 + $0x40] sm:$0xff]
        %v330 = vld [vmem:[%s252 + $0x48] sm:$0xff]
        %v331 = vld [vmem:[%s252 + $0x50] sm:$0xff]
        %v332 = vld [vmem:[%s252 + $0x58] sm:$0xff]
        %v333 = vld [vmem:[%s252 + $0x60] sm:$0xff]
        %v334 = vld [vmem:[%s252 + $0x68] sm:$0xff]
        %v335 = vld [vmem:[%s252 + $0x70] sm:$0xff]
        %v336 = vld [vmem:[%s252 + $0x78] sm:$0xff]
        %v337 = vld [vmem:[%s252 + $0x80] sm:$0xff]
        %v338 = vld [vmem:[%s252 + $0x88] sm:$0xff]
        %v339 = vld [vmem:[%s252 + $0x90] sm:$0xff]
        %v340 = vld [vmem:[%s252 + $0x98] sm:$0xff]
        %v341 = vld [vmem:[%s252 + $0xa0] sm:$0xff]
        %v342 = vld [vmem:[%s252 + $0xa8] sm:$0xff]
        %v343 = vld [vmem:[%s252 + $0xb0] sm:$0xff]
        %v344 = vld [vmem:[%s252 + $0xb8] sm:$0xff]
        %v345 = vld [vmem:[%s252 + $0xc0] sm:$0xff]
        %v346 = vld [vmem:[%s252 + $0xc8] sm:$0xff]
        %v347 = vld [vmem:[%s252 + $0xd0] sm:$0xff]
        %v348 = vld [vmem:[%s252 + $0xd8] sm:$0xff]
        %v349 = vld [vmem:[%s252 + $0xe0] sm:$0xff]
        %v350 = vld [vmem:[%s252 + $0xe8] sm:$0xff]
        %v351 = vld [vmem:[%s252 + $0xf0] sm:$0xff]
        %v352 = vld [vmem:[%s252 + $0xf8] sm:$0xff]
        %v353 = vld [vmem:[%s252 + $0x100] sm:$0xff]
        %v354 = vld [vmem:[%s252 + $0x108] sm:$0xff]
        %v355 = vld [vmem:[%s252 + $0x110] sm:$0xff]
        %v356 = vld [vmem:[%s252 + $0x118] sm:$0xff]
        %v357 = vld [vmem:[%s252 + $0x120] sm:$0xff]
        %v358 = vld [vmem:[%s252 + $0x128] sm:$0xff]
        %v359 = vld [vmem:[%s252 + $0x130] sm:$0xff]
        %v360 = vld [vmem:[%s252 + $0x138] sm:$0xff]
        %v361 = vld [vmem:[%s252 + $0x140] sm:$0xff]
        %v362 = vld [vmem:[%s252 + $0x148] sm:$0xff]
        %v363 = vld [vmem:[%s252 + $0x150] sm:$0xff]
        %v364 = vld [vmem:[%s252 + $0x158] sm:$0xff]
        %v365 = vld [vmem:[%s252 + $0x160] sm:$0xff]
        %v366 = vld [vmem:[%s252 + $0x168] sm:$0xff]
        %v367 = vld [vmem:[%s252 + $0x170] sm:$0xff]
        %v368 = vld [vmem:[%s252 + $0x178] sm:$0xff]
        %v369 = vld [vmem:[%s252 + $0x180] sm:$0xff]
        %v370 = vld [vmem:[%s252 + $0x188] sm:$0xff]
        %v371 = vld [vmem:[%s252 + $0x190] sm:$0xff]
        %v372 = vld [vmem:[%s252 + $0x198] sm:$0xff]
        %v373 = vld [vmem:[%s252 + $0x1a0] sm:$0xff]
        %v374 = vld [vmem:[%s252 + $0x1a8] sm:$0xff]
        %v375 = vld [vmem:[%s252 + $0x1b0] sm:$0xff]
        %v376 = vld [vmem:[%s252 + $0x1b8] sm:$0xff]
        %v377 = vld [vmem:[%s252 + $0x1c0] sm:$0xff]
        %v378 = vld [vmem:[%s252 + $0x1c8] sm:$0xff]
        %v379 = vld [vmem:[%s252 + $0x1d0] sm:$0xff]
        %v380 = vld [vmem:[%s252 + $0x1d8] sm:$0xff]
        %v381 = vld [vmem:[%s252 + $0x1e0] sm:$0xff]
        %v382 = vld [vmem:[%s252 + $0x1e8] sm:$0xff]
        %v383 = vld [vmem:[%s252 + $0x1f0] sm:$0xff]
        %v384 = vld [vmem:[%s252 + $0x1f8] sm:$0xff]
        %v387 = vunpack.c.l.b16 %v319
        %v388 = vunpack.c.h.b16 %v319
        %v389 = vunpack.c.l.b16 %v320
        %v390 = vunpack.c.h.b16 %v320
        %v391 = vpack.c.b16 %v389, %v387
        %v392 = vpack.c.b16 %v390, %v388
        %v459 = vunpack.c.l.b16 %v321
        %v460 = vunpack.c.h.b16 %v321
        %v461 = vunpack.c.l.b16 %v322
        %v462 = vunpack.c.h.b16 %v322
        %v463 = vunpack.c.l.b16 %v323
        %v464 = vunpack.c.h.b16 %v323
        %v465 = vunpack.c.l.b16 %v324
        %v466 = vunpack.c.h.b16 %v324
        %v467 = vunpack.c.l.b16 %v325
        %v468 = vunpack.c.h.b16 %v325
        %v469 = vunpack.c.l.b16 %v326
        %v470 = vunpack.c.h.b16 %v326
        %v471 = vunpack.c.l.b16 %v327
        %v472 = vunpack.c.h.b16 %v327
        %v473 = vunpack.c.l.b16 %v328
        %v474 = vunpack.c.h.b16 %v328
        %v475 = vunpack.c.l.b16 %v329
        %v476 = vunpack.c.h.b16 %v329
        %v477 = vunpack.c.l.b16 %v330
        %v478 = vunpack.c.h.b16 %v330
        %v479 = vunpack.c.l.b16 %v331
        %v480 = vunpack.c.h.b16 %v331
        %v481 = vunpack.c.l.b16 %v332
        %v482 = vunpack.c.h.b16 %v332
        %v483 = vunpack.c.l.b16 %v333
        %v484 = vunpack.c.h.b16 %v333
        %v485 = vunpack.c.l.b16 %v334
        %v486 = vunpack.c.h.b16 %v334
        %v487 = vunpack.c.l.b16 %v335
        %v488 = vunpack.c.h.b16 %v335
        %v489 = vunpack.c.l.b16 %v336
        %v490 = vunpack.c.h.b16 %v336
        %v491 = vunpack.c.l.b16 %v337
        %v492 = vunpack.c.h.b16 %v337
        %v493 = vunpack.c.l.b16 %v338
        %v494 = vunpack.c.h.b16 %v338
        %v495 = vunpack.c.l.b16 %v339
        %v496 = vunpack.c.h.b16 %v339
        %v497 = vunpack.c.l.b16 %v340
        %v498 = vunpack.c.h.b16 %v340
        %v499 = vunpack.c.l.b16 %v341
        %v500 = vunpack.c.h.b16 %v341
        %v501 = vunpack.c.l.b16 %v342
        %v502 = vunpack.c.h.b16 %v342
        %v503 = vunpack.c.l.b16 %v343
        %v504 = vunpack.c.h.b16 %v343
        %v505 = vunpack.c.l.b16 %v344
        %v506 = vunpack.c.h.b16 %v344
        %v507 = vunpack.c.l.b16 %v345
        %v508 = vunpack.c.h.b16 %v345
        %v509 = vunpack.c.l.b16 %v346
        %v510 = vunpack.c.h.b16 %v346
        %v511 = vunpack.c.l.b16 %v347
        %v512 = vunpack.c.h.b16 %v347
        %v513 = vunpack.c.l.b16 %v348
        %v514 = vunpack.c.h.b16 %v348
        %v515 = vunpack.c.l.b16 %v349
        %v516 = vunpack.c.h.b16 %v349
        %v517 = vunpack.c.l.b16 %v350
        %v518 = vunpack.c.h.b16 %v350
        %v519 = vunpack.c.l.b16 %v351
        %v520 = vunpack.c.h.b16 %v351
        %v521 = vunpack.c.l.b16 %v352
        %v522 = vunpack.c.h.b16 %v352
        %v523 = vunpack.c.l.b16 %v353
        %v524 = vunpack.c.h.b16 %v353
        %v525 = vunpack.c.l.b16 %v354
        %v526 = vunpack.c.h.b16 %v354
        %v527 = vunpack.c.l.b16 %v355
        %v528 = vunpack.c.h.b16 %v355
        %v529 = vunpack.c.l.b16 %v356
        %v530 = vunpack.c.h.b16 %v356
        %v531 = vunpack.c.l.b16 %v357
        %v532 = vunpack.c.h.b16 %v357
        %v533 = vunpack.c.l.b16 %v358
        %v534 = vunpack.c.h.b16 %v358
        %v535 = vunpack.c.l.b16 %v359
        %v536 = vunpack.c.h.b16 %v359
        %v537 = vunpack.c.l.b16 %v360
        %v538 = vunpack.c.h.b16 %v360
        %v539 = vunpack.c.l.b16 %v361
        %v540 = vunpack.c.h.b16 %v361
        %v541 = vunpack.c.l.b16 %v362
        %v542 = vunpack.c.h.b16 %v362
        %v543 = vunpack.c.l.b16 %v363
        %v544 = vunpack.c.h.b16 %v363
        %v545 = vunpack.c.l.b16 %v364
        %v546 = vunpack.c.h.b16 %v364
        %v547 = vunpack.c.l.b16 %v365
        %v548 = vunpack.c.h.b16 %v365
        %v549 = vunpack.c.l.b16 %v366
        %v550 = vunpack.c.h.b16 %v366
        %v551 = vunpack.c.l.b16 %v367
        %v552 = vunpack.c.h.b16 %v367
        %v553 = vunpack.c.l.b16 %v368
        %v554 = vunpack.c.h.b16 %v368
        %v555 = vunpack.c.l.b16 %v369
        %v556 = vunpack.c.h.b16 %v369
        %v557 = vunpack.c.l.b16 %v370
        %v558 = vunpack.c.h.b16 %v370
        %v559 = vunpack.c.l.b16 %v371
        %v560 = vunpack.c.h.b16 %v371
        %v561 = vunpack.c.l.b16 %v372
        %v562 = vunpack.c.h.b16 %v372
        %v563 = vunpack.c.l.b16 %v373
        %v564 = vunpack.c.h.b16 %v373
        %v565 = vunpack.c.l.b16 %v374
        %v566 = vunpack.c.h.b16 %v374
        %v567 = vunpack.c.l.b16 %v375
        %v568 = vunpack.c.h.b16 %v375
        %v569 = vunpack.c.l.b16 %v376
        %v570 = vunpack.c.h.b16 %v376
        %v571 = vunpack.c.l.b16 %v377
        %v572 = vunpack.c.h.b16 %v377
        %v573 = vunpack.c.l.b16 %v378
        %v574 = vunpack.c.h.b16 %v378
        %v575 = vunpack.c.l.b16 %v379
        %v576 = vunpack.c.h.b16 %v379
        %v577 = vunpack.c.l.b16 %v380
        %v578 = vunpack.c.h.b16 %v380
        %v579 = vunpack.c.l.b16 %v381
        %v580 = vunpack.c.h.b16 %v381
        %v581 = vunpack.c.l.b16 %v382
        %v582 = vunpack.c.h.b16 %v382
        %v583 = vunpack.c.l.b16 %v383
        %v584 = vunpack.c.h.b16 %v383
        %v585 = vunpack.c.l.b16 %v384
        %v586 = vunpack.c.h.b16 %v384
        %v587 = vpack.c.b16 %v463, %v459
        %v588 = vpack.c.b16 %v464, %v460
        %v589 = vpack.c.b16 %v465, %v461
        %v590 = vpack.c.b16 %v466, %v462
        %v591 = vpack.c.b16 %v471, %v467
        %v592 = vpack.c.b16 %v472, %v468
        %v593 = vpack.c.b16 %v473, %v469
        %v594 = vpack.c.b16 %v474, %v470
        %v595 = vpack.c.b16 %v479, %v475
        %v596 = vpack.c.b16 %v480, %v476
        %v597 = vpack.c.b16 %v481, %v477
        %v598 = vpack.c.b16 %v482, %v478
        %v599 = vpack.c.b16 %v487, %v483
        %v600 = vpack.c.b16 %v488, %v484
        %v601 = vpack.c.b16 %v489, %v485
        %v602 = vpack.c.b16 %v490, %v486
        %v603 = vpack.c.b16 %v495, %v491
        %v604 = vpack.c.b16 %v496, %v492
        %v605 = vpack.c.b16 %v497, %v493
        %v606 = vpack.c.b16 %v498, %v494
        %v607 = vpack.c.b16 %v503, %v499
        %v608 = vpack.c.b16 %v504, %v500
        %v609 = vpack.c.b16 %v505, %v501
        %v610 = vpack.c.b16 %v506, %v502
        %v611 = vpack.c.b16 %v511, %v507
        %v612 = vpack.c.b16 %v512, %v508
        %v613 = vpack.c.b16 %v513, %v509
        %v614 = vpack.c.b16 %v514, %v510
        %v615 = vpack.c.b16 %v519, %v515
        %v616 = vpack.c.b16 %v520, %v516
        %v617 = vpack.c.b16 %v521, %v517
        %v618 = vpack.c.b16 %v522, %v518
        %v619 = vpack.c.b16 %v527, %v523
        %v620 = vpack.c.b16 %v528, %v524
        %v621 = vpack.c.b16 %v529, %v525
        %v622 = vpack.c.b16 %v530, %v526
        %v623 = vpack.c.b16 %v535, %v531
        %v624 = vpack.c.b16 %v536, %v532
        %v625 = vpack.c.b16 %v537, %v533
        %v626 = vpack.c.b16 %v538, %v534
        %v627 = vpack.c.b16 %v543, %v539
        %v628 = vpack.c.b16 %v544, %v540
        %v629 = vpack.c.b16 %v545, %v541
        %v630 = vpack.c.b16 %v546, %v542
        %v631 = vpack.c.b16 %v551, %v547
        %v632 = vpack.c.b16 %v552, %v548
        %v633 = vpack.c.b16 %v553, %v549
        %v634 = vpack.c.b16 %v554, %v550
        %v635 = vpack.c.b16 %v559, %v555
        %v636 = vpack.c.b16 %v560, %v556
        %v637 = vpack.c.b16 %v561, %v557
        %v638 = vpack.c.b16 %v562, %v558
        %v639 = vpack.c.b16 %v567, %v563
        %v640 = vpack.c.b16 %v568, %v564
        %v641 = vpack.c.b16 %v569, %v565
        %v642 = vpack.c.b16 %v570, %v566
        %v643 = vpack.c.b16 %v575, %v571
        %v644 = vpack.c.b16 %v576, %v572
        %v645 = vpack.c.b16 %v577, %v573
        %v646 = vpack.c.b16 %v578, %v574
        %v647 = vpack.c.b16 %v583, %v579
        %v648 = vpack.c.b16 %v584, %v580
        %v649 = vpack.c.b16 %v585, %v581
        %v650 = vpack.c.b16 %v586, %v582
        %715 = vmatprep.subr.bf16.mxu0 %v616
        %716 = vmatpush1.bf16.msra.mxu0 %v615
        %717 = vmatprep.subr.bf16.mxu0 %v612
        %718 = vmatpush1.bf16.msra.mxu0 %v611
        %719 = vmatprep.subr.bf16.mxu0 %v608
        %720 = vmatpush1.bf16.msra.mxu0 %v607
        %721 = vmatprep.subr.bf16.mxu0 %v604
        %722 = vmatpush1.bf16.msra.mxu0 %v603
        %723 = vmatprep.subr.bf16.mxu0 %v600
        %724 = vmatpush1.bf16.msra.mxu0 %v599
        %725 = vmatprep.subr.bf16.mxu0 %v596
        %726 = vmatpush1.bf16.msra.mxu0 %v595
        %727 = vmatprep.subr.bf16.mxu0 %v592
        %728 = vmatpush1.bf16.msra.mxu0 %v591
        %729 = vmatprep.subr.bf16.mxu0 %v588
        %730 = vmatpush1.bf16.msra.mxu0 %v587
        %731 = vmatprep.subr.bf16.mxu0 %v648
        %732 = vmatpush2.bf16.msra.mxu0 %v647
        %733 = vmatprep.subr.bf16.mxu0 %v644
        %734 = vmatpush2.bf16.msra.mxu0 %v643
        %735 = vmatprep.subr.bf16.mxu0 %v640
        %736 = vmatpush2.bf16.msra.mxu0 %v639
        %737 = vmatprep.subr.bf16.mxu0 %v636
        %738 = vmatpush2.bf16.msra.mxu0 %v635
        %739 = vmatprep.subr.bf16.mxu0 %v632
        %740 = vmatpush2.bf16.msra.mxu0 %v631
        %741 = vmatprep.subr.bf16.mxu0 %v628
        %742 = vmatpush2.bf16.msra.mxu0 %v627
        %743 = vmatprep.subr.bf16.mxu0 %v624
        %744 = vmatpush2.bf16.msra.mxu0 %v623
        %745 = vmatprep.subr.bf16.mxu0 %v620
        %746 = vmatpush2.bf16.msra.mxu0 %v619
        %747 = vmatprep.mubr.bf16.mxu0 %v392
        %748 = vmatmul.mubr.bf16.gmra.mxu0 %v391
        %v749 = vpop.f32.mrf.mxu0
        %v750 = vadd.f32 0.0, %v749
        %v751 = vpop.f32.mrf.mxu0
        %v752 = vadd.f32 0.0, %v751
        %v753 = vpop.f32.mrf.mxu0
        %v754 = vadd.f32 0.0, %v753
        %v755 = vpop.f32.mrf.mxu0
        %v756 = vadd.f32 0.0, %v755
        %757 = vdwg.mxu0
        %758 = vmatprep.subr.bf16.mxu0 %v618
        %759 = vmatpush1.bf16.msra.mxu0 %v617
        %760 = vmatprep.subr.bf16.mxu0 %v614
        %761 = vmatpush1.bf16.msra.mxu0 %v613
        %762 = vmatprep.subr.bf16.mxu0 %v610
        %763 = vmatpush1.bf16.msra.mxu0 %v609
        %764 = vmatprep.subr.bf16.mxu0 %v606
        %765 = vmatpush1.bf16.msra.mxu0 %v605
        %766 = vmatprep.subr.bf16.mxu0 %v602
        %767 = vmatpush1.bf16.msra.mxu0 %v601
        %768 = vmatprep.subr.bf16.mxu0 %v598
        %769 = vmatpush1.bf16.msra.mxu0 %v597
        %770 = vmatprep.subr.bf16.mxu0 %v594
        %771 = vmatpush1.bf16.msra.mxu0 %v593
        %772 = vmatprep.subr.bf16.mxu0 %v590
        %773 = vmatpush1.bf16.msra.mxu0 %v589
        %774 = vmatprep.subr.bf16.mxu0 %v650
        %775 = vmatpush2.bf16.msra.mxu0 %v649
        %776 = vmatprep.subr.bf16.mxu0 %v646
        %777 = vmatpush2.bf16.msra.mxu0 %v645
        %778 = vmatprep.subr.bf16.mxu0 %v642
        %779 = vmatpush2.bf16.msra.mxu0 %v641
        %780 = vmatprep.subr.bf16.mxu0 %v638
        %781 = vmatpush2.bf16.msra.mxu0 %v637
        %782 = vmatprep.subr.bf16.mxu0 %v634
        %783 = vmatpush2.bf16.msra.mxu0 %v633
        %784 = vmatprep.subr.bf16.mxu0 %v630
        %785 = vmatpush2.bf16.msra.mxu0 %v629
        %786 = vmatprep.subr.bf16.mxu0 %v626
        %787 = vmatpush2.bf16.msra.mxu0 %v625
        %788 = vmatprep.subr.bf16.mxu0 %v622
        %789 = vmatpush2.bf16.msra.mxu0 %v621
        %790 = vmatprep.mubr.bf16.mxu0 %v392
        %791 = vmatmul.mubr.bf16.gmra.mxu0 %v391
        %v792 = vpop.f32.mrf.mxu0
        %v793 = vadd.f32 0.0, %v792
        %v794 = vpop.f32.mrf.mxu0
        %v795 = vadd.f32 0.0, %v794
        %v796 = vpop.f32.mrf.mxu0
        %v797 = vadd.f32 0.0, %v796
        %v798 = vpop.f32.mrf.mxu0
        %v799 = vadd.f32 0.0, %v798
        %800 = vdwg.mxu0
        %v801 = vld [vmem:[%s261] sm:$0xf]
        %v803 = vlaneseq
        %v804 = vshrl.u32 %v803, 7
        %v805 = vsub.s32 0, %v804
        %v806 = vrot.slane %v801, %v805
        %v807 = vlaneseq
        %v808 = vshrl.u32 %v807, 7
        %v809 = vsub.s32 1, %v808
        %v810 = vrot.slane %v801, %v809
        %v811 = vlaneseq
        %v812 = vshrl.u32 %v811, 7
        %v813 = vsub.s32 2, %v812
        %v814 = vrot.slane %v801, %v813
        %v815 = vlaneseq
        %v816 = vshrl.u32 %v815, 7
        %v817 = vsub.s32 3, %v816
        %v818 = vrot.slane %v801, %v817
        %v823 = vmul.f32 %v750, %v806
        %v824 = vmul.f32 %v752, %v810
        %v825 = vmul.f32 %v793, %v814
        %v826 = vmul.f32 %v795, %v818
        %v827 = vmul.f32 %v754, %v806
        %v828 = vmul.f32 %v756, %v810
        %v829 = vmul.f32 %v797, %v814
        %v830 = vmul.f32 %v799, %v818
        %v831 = vmax.f32 %v823, -10.0
        %v832 = vmax.f32 %v824, -10.0
        %v833 = vmax.f32 %v825, -10.0
        %v834 = vmax.f32 %v826, -10.0
        %v835 = vmax.f32 %v827, -10.0
        %v836 = vmax.f32 %v828, -10.0
        %v837 = vmax.f32 %v829, -10.0
        %v838 = vmax.f32 %v830, -10.0
        %v839 = vmin.f32 %v831, 10.0
        %v840 = vmin.f32 %v832, 10.0
        %v841 = vmin.f32 %v833, 10.0
        %v842 = vmin.f32 %v834, 10.0
        %v843 = vmin.f32 %v835, 10.0
        %v844 = vmin.f32 %v836, 10.0
        %v845 = vmin.f32 %v837, 10.0
        %v846 = vmin.f32 %v838, 10.0
        %s847 = smul.u32 %s28, 512
        %v848 = vld [vmem:[%s315] sm:$0xff]
        %v849 = vld [vmem:[%s315 + $0x8] sm:$0xff]
        %v850 = vstv %s847
        %v851 = vsub.s32 %v848, %v850
        %v852 = vsub.s32 %v849, %v850
        %v853 = vlaneseq
        %v854 = vand.u32 %v853, 127
        %v855 = vadd.s32 %v854, 128
        %v856 = vadd.s32 %v854, 256
        %v857 = vadd.s32 %v854, 384
        %858 = vset.pattern.permute.xlu0 0
        %859 = vperm.xlu0 %858, %v851
        %v860 = vpop.permute.xlu0 %859
        %861 = vset.pattern.permute.xlu0 0
        %862 = vperm.xlu0 %861, %v852
        %v863 = vpop.permute.xlu0 %862
        %vm864 = vcmp.eq.s32.totalorder %v854, %v860
        %vm865 = vcmp.eq.s32.totalorder %v855, %v860
        %vm866 = vcmp.eq.s32.totalorder %v856, %v860
        %vm867 = vcmp.eq.s32.totalorder %v857, %v860
        %vm868 = vcmp.eq.s32.totalorder %v854, %v863
        %vm869 = vcmp.eq.s32.totalorder %v855, %v863
        %vm870 = vcmp.eq.s32.totalorder %v856, %v863
        %vm871 = vcmp.eq.s32.totalorder %v857, %v863
        %v872 = vsel %vm864, %v839, 0.0
        %v873 = vsel %vm865, %v840, 0.0
        %v874 = vsel %vm866, %v841, 0.0
        %v875 = vsel %vm867, %v842, 0.0
        %v876 = vsel %vm868, %v843, 0.0
        %v877 = vsel %vm869, %v844, 0.0
        %v878 = vsel %vm870, %v845, 0.0
        %v879 = vsel %vm871, %v846, 0.0
        %v880 = vadd.f32 %v872, %v873
        %v881 = vadd.f32 %v880, %v874
        %v882 = vadd.f32 %v881, %v875
        %883 = vadd.xlane.f32.xlu0 %v882
        %v884 = vpop.xlane.xlu0 %883
        %v885 = vadd.f32 %v876, %v877
        %v886 = vadd.f32 %v885, %v878
        %v887 = vadd.f32 %v886, %v879
        %888 = vadd.xlane.f32.xlu0 %v887
        %v889 = vpop.xlane.xlu0 %888
        %v890 = vmul.f32 %v884, 0.1
        %v891 = vmul.f32 %v889, 0.1
        %v892 = vmul.f32 %v890, %v890
        %v893 = vmul.f32 %v891, %v891
        %v894 = vsub.f32 1.0, %v892
        %v895 = vsub.f32 1.0, %v893
        %v896 = vmax.f32 %v894, 0.0
        %v897 = vmax.f32 %v895, 0.0
        %v898 = vrsqrt.pop %v896
        %v899 = vmul.f32 %v896, %v898
        %vm900 = vcmp.eq.f32.partialorder %v896, inf
        %v901 = vsel %vm900, %v896, %v899
        %vm902 = vcmp.eq.f32.partialorder %v896, 0.0
        %v903 = vand.u32 %v896, 2147483648
        %v904 = vsel %vm902, %v903, %v901
        %v905 = vrsqrt.pop %v897
        %v906 = vmul.f32 %v897, %v905
        %vm907 = vcmp.eq.f32.partialorder %v897, inf
        %v908 = vsel %vm907, %v897, %v906
        %vm909 = vcmp.eq.f32.partialorder %v897, 0.0
        %v910 = vand.u32 %v897, 2147483648
        %v911 = vsel %vm909, %v910, %v908
        %v912 = vmul.f32 %v890, 0.87758255
        %v913 = vmul.f32 %v891, 0.87758255
        %v914 = vmul.f32 %v904, 0.47942555
        %v915 = vmul.f32 %v911, 0.47942555
        %v916 = vsub.f32 %v912, %v914
        %v917 = vsub.f32 %v913, %v915
        %vm918 = vcmp.gt.f32.partialorder %v890, -0.87758255
        %vm919 = vcmp.gt.f32.partialorder %v891, -0.87758255
        %v920 = vsub.f32 %v890, 0.23971277
        %v921 = vsub.f32 %v891, 0.23971277
        %v922 = vsel %vm918, %v916, %v920
        %v923 = vsel %vm919, %v917, %v921
        %v924 = vmul.f32 %v922, 10.0
        %v925 = vmul.f32 %v923, 10.0
        %v926 = vsel %vm864, %v924, %v839
        %v927 = vsel %vm865, %v924, %v840
        %v928 = vsel %vm866, %v924, %v841
        %v929 = vsel %vm867, %v924, %v842
        %v930 = vsel %vm868, %v925, %v843
        %v931 = vsel %vm869, %v925, %v844
        %v932 = vsel %vm870, %v925, %v845
        %v933 = vsel %vm871, %v925, %v846
        %934 = vst [vmem:[%s301] sm:$0xff] %v926
        %935 = vst [vmem:[%s301 + $0x8] sm:$0xff] %v927
        %936 = vst [vmem:[%s301 + $0x10] sm:$0xff] %v928
        %937 = vst [vmem:[%s301 + $0x18] sm:$0xff] %v929
        %938 = vst [vmem:[%s301 + $0x20] sm:$0xff] %v930
        %939 = vst [vmem:[%s301 + $0x28] sm:$0xff] %v931
        %940 = vst [vmem:[%s301 + $0x30] sm:$0xff] %v932
        %941 = vst [vmem:[%s301 + $0x38] sm:$0xff] %v933
        %s942 = sand.u32 %s150, 1
        %s943 = scalar_lea.sflag [#allocation4], %s942
        %s944 = sand.u32 %s150, 1
        %s945 = smul.addr %s944, 64
        %s946 = scalar_lea.vmem [#allocation7], %s945
        // Predicated region
        $region45: #{tpu_custom_call.1} parent=35 // pred_check
          %p947 = pneg %p160
        $region46: #{tpu_custom_call.1} parent=35 // pred_check_branch
          %949 = sbr.rel (%p947) target = $region48
        $region47: #{tpu_custom_call.1} parent=35 // pred_region
          %s950 = smul.u32 2, %s29
          %s951 = smul.u32 4, %s28
          %s953 = ssub.s32 1024, 1024
          %954 = vsyncadd %s943, %s953
          %s955 = smul.addr %s950, 8
          %s956 = sadd.s32 %s951, %s955
          %s957 = smul.addr %s956, 128
          %s958 = scalar_lea.hbm %s4, %s957
          %s959 = sshll.u32 %s946, 4
          %s960 = int_to_ptr.vmem [resolvable:$true] %s959
          %965 = dma.vmem_to_hbm [thread:$0]  %s960, 1024, %s958, %s943, 512, 1024, 32
        $region48: #{tpu_custom_call.1} parent=35 // pred_fallthru
          _
      $region36: #{tpu_custom_call.1} parent=5 // pred_fallthru
        _
      %p966 = scmp.le.s32.totalorder 2, %s19
      // Predicated region
      $region49: #{tpu_custom_call.1} parent=5 // pred_check
        %p967 = pneg %p966
      $region50: #{tpu_custom_call.1} parent=5 // pred_check_branch
        %969 = sbr.rel (%p967) target = $region52
      $region51: #{tpu_custom_call.1} parent=5 // pred_region
        %s970 = ssub.s32 %s19, 2
        // Predicated region
        $region53: #{tpu_custom_call.1} parent=51 // pred_check
          %p971 = pneg %p166
        $region54: #{tpu_custom_call.1} parent=51 // pred_check_branch
          %973 = sbr.rel (%p971) target = $region56
        $region55: #{tpu_custom_call.1} parent=51 // pred_region
          %s974 = sand.u32 %s151, 1
          %s975 = scalar_lea.sflag [#allocation4], %s974
          %s976 = sand.u32 %s151, 1
          %s977 = smul.addr %s976, 64
          %s978 = scalar_lea.vmem [#allocation7], %s977
          %979 = dma.done %s975, 1024
        $region56: #{tpu_custom_call.1} parent=51 // pred_fallthru
          _
      $region52: #{tpu_custom_call.1} parent=5 // pred_fallthru
        _
    $region6: #{tpu_custom_call.1} parent=1 // loop_footer
      %s23 = sadd.s32 1, %s19
    $region7: #{tpu_custom_call.1} parent=1 // loop_footer_branch
      %18 = sbr.rel target = $region3
    $region8: #{tpu_custom_call.1} parent=1 // loop_exit
      _
    %980 = vsyncpa [#allocation3], 1
    %s981 = scalar_lea.sflag [#allocation3], 1
    %982 = vsyncpa %s981, 1
    %983 = vsyncpa [#allocation6], 1
    %s984 = scalar_lea.sflag [#allocation6], 1
    %985 = vsyncpa %s984, 1
    %986 = vsyncpa [#allocation4], 1
    %s987 = scalar_lea.sflag [#allocation4], 1
    %988 = vsyncpa %s987, 1

</llo_original>
